<compile_context>
chip_gen: v6e
topology: v6e:2x2x1
jax: 0.10.0
libtpu: 0.0.40
codegen_flags: <defaults>
</compile_context>

<pallas_src>
import numpy as np
import jax
import jax.numpy as jnp
from jax.experimental import pallas as pl
from jax.experimental.pallas import tpu as pltpu

# ---- static model dims (from the module, input_length = 16) ------------------
INPUT_LENGTH = 16
K = 5
C_OUT = 32
L_CONV = INPUT_LENGTH - (K - 1)      # 12 (valid conv, stride 1)
L_POOL = L_CONV // 2                 # 6  (MaxPool1d(2))
FLAT = C_OUT * L_POOL                # 192
HID = 64
BN_EPS = 1e-5

# conv slab layout (rows of the (512, tb) conv output):
#   rows [0:FLAT)           = conv outputs at even time steps, PyTorch flatten order
#   rows [HALF:HALF+FLAT)   = conv outputs at odd  time steps, same order
# HALF = 256 keeps both pooling operands sublane-aligned; pad rows are zero, never read.
HALF = 256
CONV_SLAB = 2 * HALF                 # 512


# ---- Pallas kernel ------------------------------------------------------------
def shallow_cnn_kernel(x_ref, wconv_ref, bconv_ref, w1_ref, b1_ref, w2_ref, b2_ref,
                       out_ref):
    x = x_ref[...]                                              # (16, TB), lane = batch

    # Conv1d + BatchNorm folded into one MXU matmul producing a lane-dense slab.
    conv = jnp.dot(wconv_ref[...], x, preferred_element_type=jnp.float32)   # (512, TB)
    conv = jnp.maximum(conv + bconv_ref[...], 0.0)              # +bias/BN shift, ReLU

    # MaxPool1d(2): even/odd time-step blocks are 8-aligned sublane slices -> one VPU max.
    # Rows are already in PyTorch x.view(B, -1) order (f = c*L_POOL + t): flatten is free.
    pooled = jnp.maximum(conv[:FLAT, :], conv[HALF:HALF + FLAT, :])          # (192, TB)

    # fc1 + ReLU (MXU).
    h1 = jnp.dot(w1_ref[...], pooled, preferred_element_type=jnp.float32) + b1_ref[...]
    h1 = jnp.maximum(h1, 0.0)                                   # (64, TB)

    # Dropout(0.5): identity at inference.
    # TODO(synk): training-mode dropout (pltpu.prng_seed + prng_random_bits mask) not implemented.

    # fc2 (64 -> 1): (1,64) @ (64,TB) -> (1,TB); output stays lane-dense.
    out_ref[...] = (jnp.dot(w2_ref[...], h1, preferred_element_type=jnp.float32)
                    + b2_ref[...])


# ---- wrapper ------------------------------------------------------------------
def shallow_cnn_forward(x_bl, folded_params, *, max_tile_b=2048):
    """x_bl: (B, INPUT_LENGTH) float32 -> (B, 1) float32."""
    wconv, bconv, w1, b1, w2, b2 = folded_params
    b = x_bl.shape[0]

    # Batch rides the lane axis: tile must be a multiple of 128.  Clamp the tile so
    # that large batches produce >= 2 grid steps (both v7x TensorCores get work).
    half = -(-b // 2)
    tb = min(max_tile_b, max(128, -(-half // 128) * 128))
    b_pad = -(-b // tb) * tb

    x_t = x_bl.T                                                # (16, B) layout plumbing
    if b_pad != b:
        x_t = jnp.pad(x_t, ((0, 0), (0, b_pad - b)))
    grid = (b_pad // tb,)

    def full_spec(arr):
        return pl.BlockSpec(arr.shape, lambda i: (0, 0))        # resident weights

    out = pl.pallas_call(
        shallow_cnn_kernel,
        out_shape=jax.ShapeDtypeStruct((1, b_pad), jnp.float32),
        grid=grid,
        in_specs=[
            pl.BlockSpec((INPUT_LENGTH, tb), lambda i: (0, i)),  # full-lane input tile
            full_spec(wconv), full_spec(bconv),
            full_spec(w1), full_spec(b1),
            full_spec(w2), full_spec(b2),
        ],
        out_specs=pl.BlockSpec((1, tb), lambda i: (0, i)),       # lane-dense output tile
        compiler_params=pltpu.CompilerParams(
            dimension_semantics=("parallel",),      # shard batch tiles across TCs
            vmem_limit_bytes=48 * 1024 * 1024,      # safe on v7x (64 MiB physical VMEM)
        ),
    )(x_t, wconv, bconv, w1, b1, w2, b2)

    return out[:, :b].T                                         # (B, 1)


# ---- deterministic raw (PyTorch-layout) parameters ----------------------------
def make_raw_params(key):
    ks = jax.random.split(key, 10)
    return dict(
        conv_w=0.2 * jax.random.normal(ks[0], (C_OUT, 1, K), jnp.float32),   # (out,in,k)
        conv_b=0.1 * jax.random.normal(ks[1], (C_OUT,), jnp.float32),
        gamma=1.0 + 0.1 * jax.random.normal(ks[2], (C_OUT,), jnp.float32),
        beta=0.1 * jax.random.normal(ks[3], (C_OUT,), jnp.float32),
        r_mean=0.1 * jax.random.normal(ks[4], (C_OUT,), jnp.float32),
        r_var=jnp.abs(1.0 + 0.1 * jax.random.normal(ks[5], (C_OUT,), jnp.float32)),
        w1=0.1 * jax.random.normal(ks[6], (HID, FLAT), jnp.float32),          # (out,in)
        b1=0.1 * jax.random.normal(ks[7], (HID,), jnp.float32),
        w2=0.1 * jax.random.normal(ks[8], (1, HID), jnp.float32),
        b2=0.1 * jax.random.normal(ks[9], (1,), jnp.float32),
    )


# ---- init-time folding: Conv+BN -> Toeplitz matmul weights (transposed layout) --
def fold_params(raw):
    conv_w = np.asarray(raw["conv_w"][:, 0, :])                       # (C_OUT, K)
    bn_scale = np.asarray(raw["gamma"] / jnp.sqrt(raw["r_var"] + BN_EPS))
    w_fold = conv_w * bn_scale[:, None]                               # conv*BN scale
    b_fold = np.asarray(raw["conv_b"]) * bn_scale + np.asarray(raw["beta"]) \
        - np.asarray(raw["r_mean"]) * bn_scale                        # conv bias + BN shift

    w_np = np.zeros((CONV_SLAB, INPUT_LENGTH), np.float32)            # (512, 16)
    b_np = np.zeros((CONV_SLAB, 1), np.float32)                       # (512, 1)
    for c in range(C_OUT):
        for t in range(L_POOL):
            row_e = c * L_POOL + t            # conv output at time 2t
            row_o = HALF + row_e              # conv output at time 2t+1
            for k in range(K):
                w_np[row_e, 2 * t + k] = w_fold[c, k]
                w_np[row_o, 2 * t + 1 + k] = w_fold[c, k]
            b_np[row_e, 0] = b_fold[c]
            b_np[row_o, 0] = b_fold[c]

    wconv = jnp.asarray(w_np)                                         # (512, 16)
    bconv = jnp.asarray(b_np)                                         # (512, 1)
    w1 = raw["w1"]                                                    # (64, 192) as-is
    b1 = raw["b1"].reshape(HID, 1)                                    # (64, 1)
    w2 = raw["w2"]                                                    # (1, 64) as-is
    b2 = raw["b2"].reshape(1, 1)                                      # (1, 1)
    return (wconv, bconv, w1, b1, w2, b2)


# ---- pure-JAX reference: literal PyTorch math from the UNFOLDED params --------
def reference_forward(x_bcl, raw):
    x = x_bcl[:, 0, :]                                                # (B, L)
    conv_w = raw["conv_w"][:, 0, :]
    conv = jnp.stack(
        [jnp.sum(x[:, None, t:t + K] * conv_w[None, :, :], axis=-1) for t in range(L_CONV)],
        axis=-1) + raw["conv_b"][None, :, None]                       # (B, C, L_CONV)
    bn = (conv - raw["r_mean"][None, :, None]) / jnp.sqrt(raw["r_var"][None, :, None] + BN_EPS)
    bn = bn * raw["gamma"][None, :, None] + raw["beta"][None, :, None]
    h = jnp.maximum(bn, 0.0)
    h = jnp.max(h.reshape(h.shape[0], C_OUT, L_POOL, 2), axis=-1)     # MaxPool1d(2)
    flat = h.reshape(h.shape[0], FLAT)                                # x.view(B, -1)
    h1 = jnp.maximum(flat @ raw["w1"].T + raw["b1"][None, :], 0.0)
    return h1 @ raw["w2"].T + raw["b2"][None, :]


if __name__ == "__main__":
    B = 2
    # PyTorch-style input (B, 1, L); the singleton channel is squeezed for the kernel.
    x = jax.random.normal(jax.random.PRNGKey(0), (B, 1, INPUT_LENGTH), jnp.float32)

    raw = make_raw_params(jax.random.PRNGKey(42))
    folded = fold_params(raw)

    out = jax.block_until_ready(shallow_cnn_forward(x[:, 0, :], folded))
    ref = jax.block_until_ready(reference_forward(x, raw))

    np.testing.assert_allclose(np.asarray(out), np.asarray(ref), rtol=1e-4, atol=1e-4)
    assert out.shape == (B, 1)
    print("KERNEL_OK")
</pallas_src>

<mosaic_0001>
module attributes {stable_mosaic.version = 11 : i64} {
  func.func @shallow_cnn_kernel(%arg0: i32, %arg1: memref<16x128xf32, #tpu.memory_space<vmem>>, %arg2: memref<512x16xf32, #tpu.memory_space<vmem>>, %arg3: memref<512x1xf32, #tpu.memory_space<vmem>>, %arg4: memref<64x192xf32, #tpu.memory_space<vmem>>, %arg5: memref<64x1xf32, #tpu.memory_space<vmem>>, %arg6: memref<1x64xf32, #tpu.memory_space<vmem>>, %arg7: memref<1x1xf32, #tpu.memory_space<vmem>>, %arg8: memref<1x128xf32, #tpu.memory_space<vmem>>) attributes {dimension_semantics = [#tpu.dimension_semantics<parallel>], iteration_bounds = array<i64: 1>, scalar_prefetch = 0 : i64, scratch_operands = 0 : i64, tpu.core_type = #tpu.core_type<tc>, window_params = [{transform_indices = @transform_0, window_bounds = array<i64: 16, 128>}, {pipeline_mode = #tpu.pipeline_mode<synchronous>, transform_indices = @transform_1, window_bounds = array<i64: 512, 16>}, {pipeline_mode = #tpu.pipeline_mode<synchronous>, transform_indices = @transform_2, window_bounds = array<i64: 512, 1>}, {pipeline_mode = #tpu.pipeline_mode<synchronous>, transform_indices = @transform_3, window_bounds = array<i64: 64, 192>}, {pipeline_mode = #tpu.pipeline_mode<synchronous>, transform_indices = @transform_4, window_bounds = array<i64: 64, 1>}, {pipeline_mode = #tpu.pipeline_mode<synchronous>, transform_indices = @transform_5, window_bounds = array<i64: 1, 64>}, {pipeline_mode = #tpu.pipeline_mode<synchronous>, transform_indices = @transform_6, window_bounds = array<i64: 1, 1>}, {transform_indices = @transform_7, window_bounds = array<i64: 1, 128>}]} {
    %c0 = arith.constant 0 : index
    %c0_0 = arith.constant 0 : index
    %0 = vector.load %arg1[%c0, %c0_0] : memref<16x128xf32, #tpu.memory_space<vmem>>, vector<16x128xf32>
    %c0_1 = arith.constant 0 : index
    %c0_2 = arith.constant 0 : index
    %1 = vector.load %arg2[%c0_1, %c0_2] : memref<512x16xf32, #tpu.memory_space<vmem>>, vector<512x16xf32>
    %cst = arith.constant dense<0.000000e+00> : vector<512x128xf32>
    %2 = tpu.matmul %1, %0, %cst {dimension_numbers = #tpu.dot_dimension_numbers<[1], [0], [0], [1], [0, 0, 1, 1], [], []>} : vector<512x16xf32>, vector<16x128xf32>, vector<512x128xf32> -> vector<512x128xf32>
    %c0_3 = arith.constant 0 : index
    %c0_4 = arith.constant 0 : index
    %3 = vector.load %arg3[%c0_3, %c0_4] : memref<512x1xf32, #tpu.memory_space<vmem>>, vector<512x1xf32>
    %4 = vector.broadcast %3 : vector<512x1xf32> to vector<512x128xf32>
    %5 = arith.addf %2, %4 : vector<512x128xf32>
    %cst_5 = arith.constant 0.000000e+00 : f32
    %6 = vector.broadcast %cst_5 : f32 to vector<512x128xf32>
    %7 = arith.maximumf %5, %6 : vector<512x128xf32>
    %8 = vector.extract_strided_slice %7 {offsets = [0, 0], sizes = [192, 128], strides = [1, 1]} : vector<512x128xf32> to vector<192x128xf32>
    %9 = vector.extract_strided_slice %7 {offsets = [256, 0], sizes = [192, 128], strides = [1, 1]} : vector<512x128xf32> to vector<192x128xf32>
    %10 = arith.maximumf %8, %9 : vector<192x128xf32>
    %c0_6 = arith.constant 0 : index
    %c0_7 = arith.constant 0 : index
    %11 = vector.load %arg4[%c0_6, %c0_7] : memref<64x192xf32, #tpu.memory_space<vmem>>, vector<64x192xf32>
    %cst_8 = arith.constant dense<0.000000e+00> : vector<64x128xf32>
    %12 = tpu.matmul %11, %10, %cst_8 {dimension_numbers = #tpu.dot_dimension_numbers<[1], [0], [0], [1], [0, 0, 1, 1], [], []>} : vector<64x192xf32>, vector<192x128xf32>, vector<64x128xf32> -> vector<64x128xf32>
    %c0_9 = arith.constant 0 : index
    %c0_10 = arith.constant 0 : index
    %13 = vector.load %arg5[%c0_9, %c0_10] : memref<64x1xf32, #tpu.memory_space<vmem>>, vector<64x1xf32>
    %14 = vector.broadcast %13 : vector<64x1xf32> to vector<64x128xf32>
    %15 = arith.addf %12, %14 : vector<64x128xf32>
    %cst_11 = arith.constant 0.000000e+00 : f32
    %16 = vector.broadcast %cst_11 : f32 to vector<64x128xf32>
    %17 = arith.maximumf %15, %16 : vector<64x128xf32>
    %c0_12 = arith.constant 0 : index
    %c0_13 = arith.constant 0 : index
    %18 = vector.load %arg6[%c0_12, %c0_13] : memref<1x64xf32, #tpu.memory_space<vmem>>, vector<1x64xf32>
    %cst_14 = arith.constant dense<0.000000e+00> : vector<1x128xf32>
    %19 = tpu.matmul %18, %17, %cst_14 {dimension_numbers = #tpu.dot_dimension_numbers<[1], [0], [0], [1], [0, 0, 1, 1], [], []>} : vector<1x64xf32>, vector<64x128xf32>, vector<1x128xf32> -> vector<1x128xf32>
    %c0_15 = arith.constant 0 : index
    %c0_16 = arith.constant 0 : index
    %20 = vector.load %arg7[%c0_15, %c0_16] : memref<1x1xf32, #tpu.memory_space<vmem>>, vector<1x1xf32>
    %21 = vector.broadcast %20 : vector<1x1xf32> to vector<1x128xf32>
    %22 = arith.addf %19, %21 : vector<1x128xf32>
    %c0_17 = arith.constant 0 : index
    %c0_18 = arith.constant 0 : index
    %23 = vector.load %arg8[%c0_17, %c0_18] : memref<1x128xf32, #tpu.memory_space<vmem>>, vector<1x128xf32>
    tpu.vector_store %arg8[%c0_17, %c0_18], %22 {strides = array<i32>} : memref<1x128xf32, #tpu.memory_space<vmem>>, vector<1x128xf32>,
    return
  }
  func.func @transform_0(%arg0: i32) -> (i32, i32) {
    %c0_i32 = arith.constant 0 : i32
    %c0_i32_0 = arith.constant 0 : i32
    return %c0_i32, %arg0 : i32, i32
  }
  func.func @transform_1(%arg0: i32) -> (i32, i32) {
    %c0_i32 = arith.constant 0 : i32
    %c0_i32_0 = arith.constant 0 : i32
    %c0_i32_1 = arith.constant 0 : i32
    return %c0_i32, %c0_i32_0 : i32, i32
  }
  func.func @transform_2(%arg0: i32) -> (i32, i32) {
    %c0_i32 = arith.constant 0 : i32
    %c0_i32_0 = arith.constant 0 : i32
    %c0_i32_1 = arith.constant 0 : i32
    return %c0_i32, %c0_i32_0 : i32, i32
  }
  func.func @transform_3(%arg0: i32) -> (i32, i32) {
    %c0_i32 = arith.constant 0 : i32
    %c0_i32_0 = arith.constant 0 : i32
    %c0_i32_1 = arith.constant 0 : i32
    return %c0_i32, %c0_i32_0 : i32, i32
  }
  func.func @transform_4(%arg0: i32) -> (i32, i32) {
    %c0_i32 = arith.constant 0 : i32
    %c0_i32_0 = arith.constant 0 : i32
    %c0_i32_1 = arith.constant 0 : i32
    return %c0_i32, %c0_i32_0 : i32, i32
  }
  func.func @transform_5(%arg0: i32) -> (i32, i32) {
    %c0_i32 = arith.constant 0 : i32
    %c0_i32_0 = arith.constant 0 : i32
    %c0_i32_1 = arith.constant 0 : i32
    return %c0_i32, %c0_i32_0 : i32, i32
  }
  func.func @transform_6(%arg0: i32) -> (i32, i32) {
    %c0_i32 = arith.constant 0 : i32
    %c0_i32_0 = arith.constant 0 : i32
    %c0_i32_1 = arith.constant 0 : i32
    return %c0_i32, %c0_i32_0 : i32, i32
  }
  func.func @transform_7(%arg0: i32) -> (i32, i32) {
    %c0_i32 = arith.constant 0 : i32
    %c0_i32_0 = arith.constant 0 : i32
    return %c0_i32, %arg0 : i32, i32
  }
}

</mosaic_0001>

<llo_original>
// kernel: tpu_custom_call.1
$region0: #{tpu_custom_call.1}
  #allocation0 [shape = 'u32[]', space=smem, size = 0x4, offset = 0x4, fixed_abs, tag = 'smem constant byte address 0x4 - core index']
  #allocation1 [shape = 'u32[144,128]{1,0:T(1,128)}', space=vmem, size = 0x12000, scoped, tag = 'internal scratch']
  #allocation2 [shape = 'f32[1,1]{1,0:T(1,128)S(1)}', space=vmem, size = 0x200, scoped, tag = 'scoped memory for tpu_custom_call.1']
  %s0 = inlined_call_operand.vmem [shape: f32[16,128], index: 0, kind: input, shape index: {}]
  %s1 = inlined_call_operand.vmem [shape: f32[512,16], index: 1, kind: input, shape index: {}]
  %s2 = inlined_call_operand.vmem [shape: f32[512,1], index: 2, kind: input, shape index: {}]
  %s3 = inlined_call_operand.vmem [shape: f32[64,192], index: 3, kind: input, shape index: {}]
  %s4 = inlined_call_operand.vmem [shape: f32[64,1], index: 4, kind: input, shape index: {}]
  %s5 = inlined_call_operand.vmem [shape: f32[1,64], index: 5, kind: input, shape index: {}]
  %s6 = inlined_call_operand.<no memory space> [shape: f32[1,1], index: 6, kind: input, shape index: {}]
  %s7 = inlined_call_operand.hbm [shape: f32[1,128], index: 7, kind: output, shape index: {}]
  %s8 = sld [smem:[#allocation0]]
  $region38: #{tpu_custom_call.1} parent=0
    _
  %s10 = ssub.s32 1, %s8
  %s11 = scalar_select 0, %s10, %s8
  %v12 = vstv %s6
  %13 = vst [vmem:[#allocation2] sm:$0x1] %v12
  $region1: #{tpu_custom_call.1} parent=0
    #allocation3 [shape = 'u8[512]{0}', space=vmem, size = 0x400, scoped, tag = 'output window, operand 0, single buffered']
    #allocation4 [shape = 's32[1]{0}', space=sflag, size = 0x4, scoped, tag = 'scoped memory for tpu_custom_call.1']
    %14 = vsyncpa [#allocation4], 0
    // Predicated region
    $region2: #{tpu_custom_call.1} parent=1 // pred_check
      _
    $region3: #{tpu_custom_call.1} parent=1 // pred_check_branch
      %16 = sbr.rel (0) target = $region5
    $region4: #{tpu_custom_call.1} parent=1 // pred_region
      _
    $region5: #{tpu_custom_call.1} parent=1 // pred_fallthru
      _
    // Predicated region
    $region6: #{tpu_custom_call.1} parent=1 // pred_check
      _
    $region7: #{tpu_custom_call.1} parent=1 // pred_check_branch
      %18 = sbr.rel (0) target = $region9
    $region8: #{tpu_custom_call.1} parent=1 // pred_region
      _
    $region9: #{tpu_custom_call.1} parent=1 // pred_fallthru
      _
    // Predicated region
    $region10: #{tpu_custom_call.1} parent=1 // pred_check
      _
    $region11: #{tpu_custom_call.1} parent=1 // pred_check_branch
      %20 = sbr.rel (0) target = $region13
    $region12: #{tpu_custom_call.1} parent=1 // pred_region
      _
    $region13: #{tpu_custom_call.1} parent=1 // pred_fallthru
      _
    // Predicated region
    $region14: #{tpu_custom_call.1} parent=1 // pred_check
      _
    $region15: #{tpu_custom_call.1} parent=1 // pred_check_branch
      %22 = sbr.rel (0) target = $region17
    $region16: #{tpu_custom_call.1} parent=1 // pred_region
      _
    $region17: #{tpu_custom_call.1} parent=1 // pred_fallthru
      _
    // Predicated region
    $region18: #{tpu_custom_call.1} parent=1 // pred_check
      _
    $region19: #{tpu_custom_call.1} parent=1 // pred_check_branch
      %24 = sbr.rel (0) target = $region21
    $region20: #{tpu_custom_call.1} parent=1 // pred_region
      _
    $region21: #{tpu_custom_call.1} parent=1 // pred_fallthru
      _
    // Predicated region
    $region22: #{tpu_custom_call.1} parent=1 // pred_check
      _
    $region23: #{tpu_custom_call.1} parent=1 // pred_check_branch
      %26 = sbr.rel (0) target = $region25
    $region24: #{tpu_custom_call.1} parent=1 // pred_region
      _
    $region25: #{tpu_custom_call.1} parent=1 // pred_fallthru
      _
    // Predicated region
    $region26: #{tpu_custom_call.1} parent=1 // pred_check
      _
    $region27: #{tpu_custom_call.1} parent=1 // pred_check_branch
      %28 = sbr.rel (0) target = $region29
    $region28: #{tpu_custom_call.1} parent=1 // pred_region
      _
    $region29: #{tpu_custom_call.1} parent=1 // pred_fallthru
      _
    %v29 = vld [vmem:[%s0] sm:$0xff]
    %v30 = vld [vmem:[%s0 + $0x8] sm:$0xff]
    %v31 = vld [vmem:[%s1] sm:$0xff]
    %v32 = vld [vmem:[%s1 + $0x8] sm:$0xff]
    %v33 = vld [vmem:[%s1 + $0x10] sm:$0xff]
    %v34 = vld [vmem:[%s1 + $0x18] sm:$0xff]
    %v35 = vld [vmem:[%s1 + $0x20] sm:$0xff]
    %v36 = vld [vmem:[%s1 + $0x28] sm:$0xff]
    %v37 = vld [vmem:[%s1 + $0x30] sm:$0xff]
    %v38 = vld [vmem:[%s1 + $0x38] sm:$0xff]
    %v39 = vld [vmem:[%s1 + $0x40] sm:$0xff]
    %v40 = vld [vmem:[%s1 + $0x48] sm:$0xff]
    %v41 = vld [vmem:[%s1 + $0x50] sm:$0xff]
    %v42 = vld [vmem:[%s1 + $0x58] sm:$0xff]
    %v43 = vld [vmem:[%s1 + $0x60] sm:$0xff]
    %v44 = vld [vmem:[%s1 + $0x68] sm:$0xff]
    %v45 = vld [vmem:[%s1 + $0x70] sm:$0xff]
    %v46 = vld [vmem:[%s1 + $0x78] sm:$0xff]
    %v47 = vld [vmem:[%s1 + $0x80] sm:$0xff]
    %v48 = vld [vmem:[%s1 + $0x88] sm:$0xff]
    %v49 = vld [vmem:[%s1 + $0x90] sm:$0xff]
    %v50 = vld [vmem:[%s1 + $0x98] sm:$0xff]
    %v51 = vld [vmem:[%s1 + $0xa0] sm:$0xff]
    %v52 = vld [vmem:[%s1 + $0xa8] sm:$0xff]
    %v53 = vld [vmem:[%s1 + $0xb0] sm:$0xff]
    %v54 = vld [vmem:[%s1 + $0xb8] sm:$0xff]
    %v55 = vld [vmem:[%s1 + $0xc0] sm:$0xff]
    %v56 = vld [vmem:[%s1 + $0xc8] sm:$0xff]
    %v57 = vld [vmem:[%s1 + $0xd0] sm:$0xff]
    %v58 = vld [vmem:[%s1 + $0xd8] sm:$0xff]
    %v59 = vld [vmem:[%s1 + $0xe0] sm:$0xff]
    %v60 = vld [vmem:[%s1 + $0xe8] sm:$0xff]
    %v61 = vld [vmem:[%s1 + $0xf0] sm:$0xff]
    %v62 = vld [vmem:[%s1 + $0xf8] sm:$0xff]
    %v63 = vld [vmem:[%s1 + $0x100] sm:$0xff]
    %v64 = vld [vmem:[%s1 + $0x108] sm:$0xff]
    %v65 = vld [vmem:[%s1 + $0x110] sm:$0xff]
    %v66 = vld [vmem:[%s1 + $0x118] sm:$0xff]
    %v67 = vld [vmem:[%s1 + $0x120] sm:$0xff]
    %v68 = vld [vmem:[%s1 + $0x128] sm:$0xff]
    %v69 = vld [vmem:[%s1 + $0x130] sm:$0xff]
    %v70 = vld [vmem:[%s1 + $0x138] sm:$0xff]
    %v71 = vld [vmem:[%s1 + $0x140] sm:$0xff]
    %v72 = vld [vmem:[%s1 + $0x148] sm:$0xff]
    %v73 = vld [vmem:[%s1 + $0x150] sm:$0xff]
    %v74 = vld [vmem:[%s1 + $0x158] sm:$0xff]
    %v75 = vld [vmem:[%s1 + $0x160] sm:$0xff]
    %v76 = vld [vmem:[%s1 + $0x168] sm:$0xff]
    %v77 = vld [vmem:[%s1 + $0x170] sm:$0xff]
    %v78 = vld [vmem:[%s1 + $0x178] sm:$0xff]
    %v79 = vld [vmem:[%s1 + $0x180] sm:$0xff]
    %v80 = vld [vmem:[%s1 + $0x188] sm:$0xff]
    %v81 = vld [vmem:[%s1 + $0x190] sm:$0xff]
    %v82 = vld [vmem:[%s1 + $0x198] sm:$0xff]
    %v83 = vld [vmem:[%s1 + $0x1a0] sm:$0xff]
    %v84 = vld [vmem:[%s1 + $0x1a8] sm:$0xff]
    %v85 = vld [vmem:[%s1 + $0x1b0] sm:$0xff]
    %v86 = vld [vmem:[%s1 + $0x1b8] sm:$0xff]
    %v87 = vld [vmem:[%s1 + $0x1c0] sm:$0xff]
    %v88 = vld [vmem:[%s1 + $0x1c8] sm:$0xff]
    %v89 = vld [vmem:[%s1 + $0x1d0] sm:$0xff]
    %v90 = vld [vmem:[%s1 + $0x1d8] sm:$0xff]
    %v91 = vld [vmem:[%s1 + $0x1e0] sm:$0xff]
    %v92 = vld [vmem:[%s1 + $0x1e8] sm:$0xff]
    %v93 = vld [vmem:[%s1 + $0x1f0] sm:$0xff]
    %v94 = vld [vmem:[%s1 + $0x1f8] sm:$0xff]
    %v95 = vld [vmem:[%s2] sm:$0xff]
    %v96 = vld [vmem:[%s2 + $0x8] sm:$0xff]
    %v97 = vld [vmem:[%s2 + $0x10] sm:$0xff]
    %v98 = vld [vmem:[%s2 + $0x18] sm:$0xff]
    %v99 = vld [vmem:[%s2 + $0x20] sm:$0xff]
    %v100 = vld [vmem:[%s2 + $0x28] sm:$0xff]
    %v101 = vld [vmem:[%s2 + $0x30] sm:$0xff]
    %v102 = vld [vmem:[%s2 + $0x38] sm:$0xff]
    %v103 = vld [vmem:[%s2 + $0x40] sm:$0xff]
    %v104 = vld [vmem:[%s2 + $0x48] sm:$0xff]
    %v105 = vld [vmem:[%s2 + $0x50] sm:$0xff]
    %v106 = vld [vmem:[%s2 + $0x58] sm:$0xff]
    %v107 = vld [vmem:[%s2 + $0x60] sm:$0xff]
    %v108 = vld [vmem:[%s2 + $0x68] sm:$0xff]
    %v109 = vld [vmem:[%s2 + $0x70] sm:$0xff]
    %v110 = vld [vmem:[%s2 + $0x78] sm:$0xff]
    %v111 = vld [vmem:[%s2 + $0x80] sm:$0xff]
    %v112 = vld [vmem:[%s2 + $0x88] sm:$0xff]
    %v113 = vld [vmem:[%s2 + $0x90] sm:$0xff]
    %v114 = vld [vmem:[%s2 + $0x98] sm:$0xff]
    %v115 = vld [vmem:[%s2 + $0xa0] sm:$0xff]
    %v116 = vld [vmem:[%s2 + $0xa8] sm:$0xff]
    %v117 = vld [vmem:[%s2 + $0xb0] sm:$0xff]
    %v118 = vld [vmem:[%s2 + $0xb8] sm:$0xff]
    %v119 = vld [vmem:[%s2 + $0xc0] sm:$0xff]
    %v120 = vld [vmem:[%s2 + $0xc8] sm:$0xff]
    %v121 = vld [vmem:[%s2 + $0xd0] sm:$0xff]
    %v122 = vld [vmem:[%s2 + $0xd8] sm:$0xff]
    %v123 = vld [vmem:[%s2 + $0xe0] sm:$0xff]
    %v124 = vld [vmem:[%s2 + $0xe8] sm:$0xff]
    %v125 = vld [vmem:[%s2 + $0xf0] sm:$0xff]
    %v126 = vld [vmem:[%s2 + $0xf8] sm:$0xff]
    %v127 = vld [vmem:[%s2 + $0x100] sm:$0xff]
    %v128 = vld [vmem:[%s2 + $0x108] sm:$0xff]
    %v129 = vld [vmem:[%s2 + $0x110] sm:$0xff]
    %v130 = vld [vmem:[%s2 + $0x118] sm:$0xff]
    %v131 = vld [vmem:[%s2 + $0x120] sm:$0xff]
    %v132 = vld [vmem:[%s2 + $0x128] sm:$0xff]
    %v133 = vld [vmem:[%s2 + $0x130] sm:$0xff]
    %v134 = vld [vmem:[%s2 + $0x138] sm:$0xff]
    %v135 = vld [vmem:[%s2 + $0x140] sm:$0xff]
    %v136 = vld [vmem:[%s2 + $0x148] sm:$0xff]
    %v137 = vld [vmem:[%s2 + $0x150] sm:$0xff]
    %v138 = vld [vmem:[%s2 + $0x158] sm:$0xff]
    %v139 = vld [vmem:[%s2 + $0x160] sm:$0xff]
    %v140 = vld [vmem:[%s2 + $0x168] sm:$0xff]
    %v141 = vld [vmem:[%s2 + $0x170] sm:$0xff]
    %v142 = vld [vmem:[%s2 + $0x178] sm:$0xff]
    %v143 = vld [vmem:[%s2 + $0x180] sm:$0xff]
    %v144 = vld [vmem:[%s2 + $0x188] sm:$0xff]
    %v145 = vld [vmem:[%s2 + $0x190] sm:$0xff]
    %v146 = vld [vmem:[%s2 + $0x198] sm:$0xff]
    %v147 = vld [vmem:[%s2 + $0x1a0] sm:$0xff]
    %v148 = vld [vmem:[%s2 + $0x1a8] sm:$0xff]
    %v149 = vld [vmem:[%s2 + $0x1b0] sm:$0xff]
    %v150 = vld [vmem:[%s2 + $0x1b8] sm:$0xff]
    %v151 = vld [vmem:[%s2 + $0x1c0] sm:$0xff]
    %v152 = vld [vmem:[%s2 + $0x1c8] sm:$0xff]
    %v153 = vld [vmem:[%s2 + $0x1d0] sm:$0xff]
    %v154 = vld [vmem:[%s2 + $0x1d8] sm:$0xff]
    %v155 = vld [vmem:[%s2 + $0x1e0] sm:$0xff]
    %v156 = vld [vmem:[%s2 + $0x1e8] sm:$0xff]
    %v157 = vld [vmem:[%s2 + $0x1f0] sm:$0xff]
    %v158 = vld [vmem:[%s2 + $0x1f8] sm:$0xff]
    %160 = vset.pattern.permute.xlu0 0
    %161 = vperm.xlu0 %160, %v95
    %v162 = vpop.permute.xlu0 %161
    %165 = vset.pattern.permute.xlu0 0
    %166 = vperm.xlu0 %165, %v96
    %v167 = vpop.permute.xlu0 %166
    %170 = vset.pattern.permute.xlu0 0
    %171 = vperm.xlu0 %170, %v97
    %v172 = vpop.permute.xlu0 %171
    %175 = vset.pattern.permute.xlu0 0
    %176 = vperm.xlu0 %175, %v98
    %v177 = vpop.permute.xlu0 %176
    %180 = vset.pattern.permute.xlu0 0
    %181 = vperm.xlu0 %180, %v99
    %v182 = vpop.permute.xlu0 %181
    %185 = vset.pattern.permute.xlu0 0
    %186 = vperm.xlu0 %185, %v100
    %v187 = vpop.permute.xlu0 %186
    %190 = vset.pattern.permute.xlu0 0
    %191 = vperm.xlu0 %190, %v101
    %v192 = vpop.permute.xlu0 %191
    %195 = vset.pattern.permute.xlu0 0
    %196 = vperm.xlu0 %195, %v102
    %v197 = vpop.permute.xlu0 %196
    %200 = vset.pattern.permute.xlu0 0
    %201 = vperm.xlu0 %200, %v103
    %v202 = vpop.permute.xlu0 %201
    %205 = vset.pattern.permute.xlu0 0
    %206 = vperm.xlu0 %205, %v104
    %v207 = vpop.permute.xlu0 %206
    %210 = vset.pattern.permute.xlu0 0
    %211 = vperm.xlu0 %210, %v105
    %v212 = vpop.permute.xlu0 %211
    %215 = vset.pattern.permute.xlu0 0
    %216 = vperm.xlu0 %215, %v106
    %v217 = vpop.permute.xlu0 %216
    %220 = vset.pattern.permute.xlu0 0
    %221 = vperm.xlu0 %220, %v107
    %v222 = vpop.permute.xlu0 %221
    %225 = vset.pattern.permute.xlu0 0
    %226 = vperm.xlu0 %225, %v108
    %v227 = vpop.permute.xlu0 %226
    %230 = vset.pattern.permute.xlu0 0
    %231 = vperm.xlu0 %230, %v109
    %v232 = vpop.permute.xlu0 %231
    %235 = vset.pattern.permute.xlu0 0
    %236 = vperm.xlu0 %235, %v110
    %v237 = vpop.permute.xlu0 %236
    %240 = vset.pattern.permute.xlu0 0
    %241 = vperm.xlu0 %240, %v111
    %v242 = vpop.permute.xlu0 %241
    %245 = vset.pattern.permute.xlu0 0
    %246 = vperm.xlu0 %245, %v112
    %v247 = vpop.permute.xlu0 %246
    %250 = vset.pattern.permute.xlu0 0
    %251 = vperm.xlu0 %250, %v113
    %v252 = vpop.permute.xlu0 %251
    %255 = vset.pattern.permute.xlu0 0
    %256 = vperm.xlu0 %255, %v114
    %v257 = vpop.permute.xlu0 %256
    %260 = vset.pattern.permute.xlu0 0
    %261 = vperm.xlu0 %260, %v115
    %v262 = vpop.permute.xlu0 %261
    %265 = vset.pattern.permute.xlu0 0
    %266 = vperm.xlu0 %265, %v116
    %v267 = vpop.permute.xlu0 %266
    %270 = vset.pattern.permute.xlu0 0
    %271 = vperm.xlu0 %270, %v117
    %v272 = vpop.permute.xlu0 %271
    %275 = vset.pattern.permute.xlu0 0
    %276 = vperm.xlu0 %275, %v118
    %v277 = vpop.permute.xlu0 %276
    %280 = vset.pattern.permute.xlu0 0
    %281 = vperm.xlu0 %280, %v119
    %v282 = vpop.permute.xlu0 %281
    %284 = vset.pattern.permute.xlu0 0
    %285 = vperm.xlu0 %284, %v120
    %v286 = vpop.permute.xlu0 %285
    %288 = vset.pattern.permute.xlu0 0
    %289 = vperm.xlu0 %288, %v121
    %v290 = vpop.permute.xlu0 %289
    %292 = vset.pattern.permute.xlu0 0
    %293 = vperm.xlu0 %292, %v122
    %v294 = vpop.permute.xlu0 %293
    %296 = vset.pattern.permute.xlu0 0
    %297 = vperm.xlu0 %296, %v123
    %v298 = vpop.permute.xlu0 %297
    %300 = vset.pattern.permute.xlu0 0
    %301 = vperm.xlu0 %300, %v124
    %v302 = vpop.permute.xlu0 %301
    %304 = vset.pattern.permute.xlu0 0
    %305 = vperm.xlu0 %304, %v125
    %v306 = vpop.permute.xlu0 %305
    %308 = vset.pattern.permute.xlu0 0
    %309 = vperm.xlu0 %308, %v126
    %v310 = vpop.permute.xlu0 %309
    %312 = vset.pattern.permute.xlu0 0
    %313 = vperm.xlu0 %312, %v127
    %v314 = vpop.permute.xlu0 %313
    %317 = vset.pattern.permute.xlu0 0
    %318 = vperm.xlu0 %317, %v128
    %v319 = vpop.permute.xlu0 %318
    %322 = vset.pattern.permute.xlu0 0
    %323 = vperm.xlu0 %322, %v129
    %v324 = vpop.permute.xlu0 %323
    %327 = vset.pattern.permute.xlu0 0
    %328 = vperm.xlu0 %327, %v130
    %v329 = vpop.permute.xlu0 %328
    %332 = vset.pattern.permute.xlu0 0
    %333 = vperm.xlu0 %332, %v131
    %v334 = vpop.permute.xlu0 %333
    %337 = vset.pattern.permute.xlu0 0
    %338 = vperm.xlu0 %337, %v132
    %v339 = vpop.permute.xlu0 %338
    %342 = vset.pattern.permute.xlu0 0
    %343 = vperm.xlu0 %342, %v133
    %v344 = vpop.permute.xlu0 %343
    %347 = vset.pattern.permute.xlu0 0
    %348 = vperm.xlu0 %347, %v134
    %v349 = vpop.permute.xlu0 %348
    %352 = vset.pattern.permute.xlu0 0
    %353 = vperm.xlu0 %352, %v135
    %v354 = vpop.permute.xlu0 %353
    %357 = vset.pattern.permute.xlu0 0
    %358 = vperm.xlu0 %357, %v136
    %v359 = vpop.permute.xlu0 %358
    %362 = vset.pattern.permute.xlu0 0
    %363 = vperm.xlu0 %362, %v137
    %v364 = vpop.permute.xlu0 %363
    %367 = vset.pattern.permute.xlu0 0
    %368 = vperm.xlu0 %367, %v138
    %v369 = vpop.permute.xlu0 %368
    %372 = vset.pattern.permute.xlu0 0
    %373 = vperm.xlu0 %372, %v139
    %v374 = vpop.permute.xlu0 %373
    %377 = vset.pattern.permute.xlu0 0
    %378 = vperm.xlu0 %377, %v140
    %v379 = vpop.permute.xlu0 %378
    %382 = vset.pattern.permute.xlu0 0
    %383 = vperm.xlu0 %382, %v141
    %v384 = vpop.permute.xlu0 %383
    %387 = vset.pattern.permute.xlu0 0
    %388 = vperm.xlu0 %387, %v142
    %v389 = vpop.permute.xlu0 %388
    %392 = vset.pattern.permute.xlu0 0
    %393 = vperm.xlu0 %392, %v143
    %v394 = vpop.permute.xlu0 %393
    %397 = vset.pattern.permute.xlu0 0
    %398 = vperm.xlu0 %397, %v144
    %v399 = vpop.permute.xlu0 %398
    %402 = vset.pattern.permute.xlu0 0
    %403 = vperm.xlu0 %402, %v145
    %v404 = vpop.permute.xlu0 %403
    %407 = vset.pattern.permute.xlu0 0
    %408 = vperm.xlu0 %407, %v146
    %v409 = vpop.permute.xlu0 %408
    %412 = vset.pattern.permute.xlu0 0
    %413 = vperm.xlu0 %412, %v147
    %v414 = vpop.permute.xlu0 %413
    %417 = vset.pattern.permute.xlu0 0
    %418 = vperm.xlu0 %417, %v148
    %v419 = vpop.permute.xlu0 %418
    %422 = vset.pattern.permute.xlu0 0
    %423 = vperm.xlu0 %422, %v149
    %v424 = vpop.permute.xlu0 %423
    %427 = vset.pattern.permute.xlu0 0
    %428 = vperm.xlu0 %427, %v150
    %v429 = vpop.permute.xlu0 %428
    %432 = vset.pattern.permute.xlu0 0
    %433 = vperm.xlu0 %432, %v151
    %v434 = vpop.permute.xlu0 %433
    %436 = vset.pattern.permute.xlu0 0
    %437 = vperm.xlu0 %436, %v152
    %v438 = vpop.permute.xlu0 %437
    %440 = vset.pattern.permute.xlu0 0
    %441 = vperm.xlu0 %440, %v153
    %v442 = vpop.permute.xlu0 %441
    %444 = vset.pattern.permute.xlu0 0
    %445 = vperm.xlu0 %444, %v154
    %v446 = vpop.permute.xlu0 %445
    %448 = vset.pattern.permute.xlu0 0
    %449 = vperm.xlu0 %448, %v155
    %v450 = vpop.permute.xlu0 %449
    %452 = vset.pattern.permute.xlu0 0
    %453 = vperm.xlu0 %452, %v156
    %v454 = vpop.permute.xlu0 %453
    %456 = vset.pattern.permute.xlu0 0
    %457 = vperm.xlu0 %456, %v157
    %v458 = vpop.permute.xlu0 %457
    %460 = vset.pattern.permute.xlu0 0
    %461 = vperm.xlu0 %460, %v158
    %v462 = vpop.permute.xlu0 %461
    %vm463 = vcmask 130048
    %v465 = vsel %vm463, %v31, 0
    %v468 = vsel %vm463, %v32, 0
    %v471 = vsel %vm463, %v33, 0
    %v474 = vsel %vm463, %v34, 0
    %v477 = vsel %vm463, %v35, 0
    %v480 = vsel %vm463, %v36, 0
    %v483 = vsel %vm463, %v37, 0
    %v486 = vsel %vm463, %v38, 0
    %v489 = vsel %vm463, %v39, 0
    %v492 = vsel %vm463, %v40, 0
    %v495 = vsel %vm463, %v41, 0
    %v498 = vsel %vm463, %v42, 0
    %v501 = vsel %vm463, %v43, 0
    %v504 = vsel %vm463, %v44, 0
    %v507 = vsel %vm463, %v45, 0
    %v510 = vsel %vm463, %v46, 0
    %v513 = vsel %vm463, %v47, 0
    %v516 = vsel %vm463, %v48, 0
    %v519 = vsel %vm463, %v49, 0
    %v522 = vsel %vm463, %v50, 0
    %v525 = vsel %vm463, %v51, 0
    %v528 = vsel %vm463, %v52, 0
    %v531 = vsel %vm463, %v53, 0
    %v534 = vsel %vm463, %v54, 0
    %v537 = vsel %vm463, %v55, 0
    %v540 = vsel %vm463, %v56, 0
    %v543 = vsel %vm463, %v57, 0
    %v546 = vsel %vm463, %v58, 0
    %v549 = vsel %vm463, %v59, 0
    %v552 = vsel %vm463, %v60, 0
    %v555 = vsel %vm463, %v61, 0
    %v558 = vsel %vm463, %v62, 0
    %v561 = vsel %vm463, %v63, 0
    %v564 = vsel %vm463, %v64, 0
    %v567 = vsel %vm463, %v65, 0
    %v570 = vsel %vm463, %v66, 0
    %v573 = vsel %vm463, %v67, 0
    %v576 = vsel %vm463, %v68, 0
    %v579 = vsel %vm463, %v69, 0
    %v582 = vsel %vm463, %v70, 0
    %v585 = vsel %vm463, %v71, 0
    %v588 = vsel %vm463, %v72, 0
    %v591 = vsel %vm463, %v73, 0
    %v594 = vsel %vm463, %v74, 0
    %v597 = vsel %vm463, %v75, 0
    %v600 = vsel %vm463, %v76, 0
    %v603 = vsel %vm463, %v77, 0
    %v606 = vsel %vm463, %v78, 0
    %v609 = vsel %vm463, %v79, 0
    %v612 = vsel %vm463, %v80, 0
    %v615 = vsel %vm463, %v81, 0
    %v618 = vsel %vm463, %v82, 0
    %v621 = vsel %vm463, %v83, 0
    %v624 = vsel %vm463, %v84, 0
    %v627 = vsel %vm463, %v85, 0
    %v630 = vsel %vm463, %v86, 0
    %v633 = vsel %vm463, %v87, 0
    %v636 = vsel %vm463, %v88, 0
    %v639 = vsel %vm463, %v89, 0
    %v642 = vsel %vm463, %v90, 0
    %v645 = vsel %vm463, %v91, 0
    %v648 = vsel %vm463, %v92, 0
    %v651 = vsel %vm463, %v93, 0
    %v654 = vsel %vm463, %v94, 0
    %656 = vmatprep.subr.mxu0 0.0
    %657 = vmatpush1.msra.mxu0 0.0
    %658 = vmatprep.subr.mxu0 0.0
    %659 = vmatpush1.msra.mxu0 0.0
    %660 = vmatprep.subr.mxu0 0.0
    %661 = vmatpush1.msra.mxu0 0.0
    %662 = vmatprep.subr.mxu0 0.0
    %663 = vmatpush1.msra.mxu0 0.0
    %664 = vmatprep.subr.mxu0 0.0
    %665 = vmatpush1.msra.mxu0 0.0
    %666 = vmatprep.subr.mxu0 0.0
    %667 = vmatpush1.msra.mxu0 0.0
    %668 = vmatprep.subr.mxu0 0.0
    %669 = vmatpush1.msra.mxu0 0.0
    %670 = vmatprep.subr.mxu0 0.0
    %671 = vmatpush1.msra.mxu0 0.0
    %672 = vmatprep.subr.mxu0 0.0
    %673 = vmatpush1.msra.mxu0 0.0
    %674 = vmatprep.subr.mxu0 0.0
    %675 = vmatpush1.msra.mxu0 0.0
    %676 = vmatprep.subr.mxu0 0.0
    %677 = vmatpush1.msra.mxu0 0.0
    %678 = vmatprep.subr.mxu0 0.0
    %679 = vmatpush1.msra.mxu0 0.0
    %680 = vmatprep.subr.mxu0 0.0
    %681 = vmatpush1.msra.mxu0 0.0
    %682 = vmatprep.subr.mxu0 0.0
    %683 = vmatpush1.msra.mxu0 0.0
    %684 = vmatprep.subr.mxu0 0.0
    %685 = vmatpush1.msra.mxu0 %v30
    %686 = vmatprep.subr.mxu0 0.0
    %687 = vmatpush1.msra.mxu0 %v29
    %688 = vmatprep.subr.mxu0 0.0
    %689 = vmatpush2.msra.mxu0 0.0
    %690 = vmatprep.subr.mxu0 0.0
    %691 = vmatpush2.msra.mxu0 0.0
    %692 = vmatprep.subr.mxu0 0.0
    %693 = vmatpush2.msra.mxu0 0.0
    %694 = vmatprep.subr.mxu0 0.0
    %695 = vmatpush2.msra.mxu0 0.0
    %696 = vmatprep.subr.mxu0 0.0
    %697 = vmatpush2.msra.mxu0 0.0
    %698 = vmatprep.subr.mxu0 0.0
    %699 = vmatpush2.msra.mxu0 0.0
    %700 = vmatprep.subr.mxu0 0.0
    %701 = vmatpush2.msra.mxu0 0.0
    %702 = vmatprep.subr.mxu0 0.0
    %703 = vmatpush2.msra.mxu0 0.0
    %704 = vmatprep.subr.mxu0 0.0
    %705 = vmatpush2.msra.mxu0 0.0
    %706 = vmatprep.subr.mxu0 0.0
    %707 = vmatpush2.msra.mxu0 0.0
    %708 = vmatprep.subr.mxu0 0.0
    %709 = vmatpush2.msra.mxu0 0.0
    %710 = vmatprep.subr.mxu0 0.0
    %711 = vmatpush2.msra.mxu0 0.0
    %712 = vmatprep.subr.mxu0 0.0
    %713 = vmatpush2.msra.mxu0 0.0
    %714 = vmatprep.subr.mxu0 0.0
    %715 = vmatpush2.msra.mxu0 0.0
    %716 = vmatprep.subr.mxu0 0.0
    %717 = vmatpush2.msra.mxu0 0.0
    %718 = vmatprep.subr.mxu0 0.0
    %719 = vmatpush2.msra.mxu0 0.0
    %720 = vmatprep.mubr.f32.mxu0 0.0
    %721 = vmatmul.mubr.f32.gmra.mxu0 %v465
    %v722 = vpop.f32.mrf.mxu0
    %v723 = vadd.f32 %v162, %v722
    %v724 = vpop.f32.mrf.mxu0
    %725 = vmatprep.mubr.f32.mxu0 0.0
    %726 = vmatmul.mubr.f32.gmra.mxu0 %v468
    %v727 = vpop.f32.mrf.mxu0
    %v728 = vadd.f32 %v167, %v727
    %v729 = vpop.f32.mrf.mxu0
    %730 = vmatprep.mubr.f32.mxu0 0.0
    %731 = vmatmul.mubr.f32.gmra.mxu0 %v471
    %v732 = vpop.f32.mrf.mxu0
    %v733 = vadd.f32 %v172, %v732
    %v734 = vpop.f32.mrf.mxu0
    %735 = vmatprep.mubr.f32.mxu0 0.0
    %736 = vmatmul.mubr.f32.gmra.mxu0 %v474
    %v737 = vpop.f32.mrf.mxu0
    %v738 = vadd.f32 %v177, %v737
    %v739 = vpop.f32.mrf.mxu0
    %740 = vmatprep.mubr.f32.mxu0 0.0
    %741 = vmatmul.mubr.f32.gmra.mxu0 %v477
    %v742 = vpop.f32.mrf.mxu0
    %v743 = vadd.f32 %v182, %v742
    %v744 = vpop.f32.mrf.mxu0
    %745 = vmatprep.mubr.f32.mxu0 0.0
    %746 = vmatmul.mubr.f32.gmra.mxu0 %v480
    %v747 = vpop.f32.mrf.mxu0
    %v748 = vadd.f32 %v187, %v747
    %v749 = vpop.f32.mrf.mxu0
    %750 = vmatprep.mubr.f32.mxu0 0.0
    %751 = vmatmul.mubr.f32.gmra.mxu0 %v483
    %v752 = vpop.f32.mrf.mxu0
    %v753 = vadd.f32 %v192, %v752
    %v754 = vpop.f32.mrf.mxu0
    %755 = vmatprep.mubr.f32.mxu0 0.0
    %756 = vmatmul.mubr.f32.gmra.mxu0 %v486
    %v757 = vpop.f32.mrf.mxu0
    %v758 = vadd.f32 %v197, %v757
    %v759 = vpop.f32.mrf.mxu0
    %760 = vmatprep.mubr.f32.mxu0 0.0
    %761 = vmatmul.mubr.f32.gmra.mxu0 %v489
    %v762 = vpop.f32.mrf.mxu0
    %v763 = vadd.f32 %v202, %v762
    %v764 = vpop.f32.mrf.mxu0
    %765 = vmatprep.mubr.f32.mxu0 0.0
    %766 = vmatmul.mubr.f32.gmra.mxu0 %v492
    %v767 = vpop.f32.mrf.mxu0
    %v768 = vadd.f32 %v207, %v767
    %v769 = vpop.f32.mrf.mxu0
    %770 = vmatprep.mubr.f32.mxu0 0.0
    %771 = vmatmul.mubr.f32.gmra.mxu0 %v495
    %v772 = vpop.f32.mrf.mxu0
    %v773 = vadd.f32 %v212, %v772
    %v774 = vpop.f32.mrf.mxu0
    %775 = vmatprep.mubr.f32.mxu0 0.0
    %776 = vmatmul.mubr.f32.gmra.mxu0 %v498
    %v777 = vpop.f32.mrf.mxu0
    %v778 = vadd.f32 %v217, %v777
    %v779 = vpop.f32.mrf.mxu0
    %780 = vmatprep.mubr.f32.mxu0 0.0
    %781 = vmatmul.mubr.f32.gmra.mxu0 %v501
    %v782 = vpop.f32.mrf.mxu0
    %v783 = vadd.f32 %v222, %v782
    %v784 = vpop.f32.mrf.mxu0
    %785 = vmatprep.mubr.f32.mxu0 0.0
    %786 = vmatmul.mubr.f32.gmra.mxu0 %v504
    %v787 = vpop.f32.mrf.mxu0
    %v788 = vadd.f32 %v227, %v787
    %v789 = vpop.f32.mrf.mxu0
    %790 = vmatprep.mubr.f32.mxu0 0.0
    %791 = vmatmul.mubr.f32.gmra.mxu0 %v507
    %v792 = vpop.f32.mrf.mxu0
    %v793 = vadd.f32 %v232, %v792
    %v794 = vpop.f32.mrf.mxu0
    %795 = vmatprep.mubr.f32.mxu0 0.0
    %796 = vmatmul.mubr.f32.gmra.mxu0 %v510
    %v797 = vpop.f32.mrf.mxu0
    %v798 = vadd.f32 %v237, %v797
    %v799 = vpop.f32.mrf.mxu0
    %800 = vmatprep.mubr.f32.mxu0 0.0
    %801 = vmatmul.mubr.f32.gmra.mxu0 %v513
    %v802 = vpop.f32.mrf.mxu0
    %v803 = vadd.f32 %v242, %v802
    %v804 = vpop.f32.mrf.mxu0
    %805 = vmatprep.mubr.f32.mxu0 0.0
    %806 = vmatmul.mubr.f32.gmra.mxu0 %v516
    %v807 = vpop.f32.mrf.mxu0
    %v808 = vadd.f32 %v247, %v807
    %v809 = vpop.f32.mrf.mxu0
    %810 = vmatprep.mubr.f32.mxu0 0.0
    %811 = vmatmul.mubr.f32.gmra.mxu0 %v519
    %v812 = vpop.f32.mrf.mxu0
    %v813 = vadd.f32 %v252, %v812
    %v814 = vpop.f32.mrf.mxu0
    %815 = vmatprep.mubr.f32.mxu0 0.0
    %816 = vmatmul.mubr.f32.gmra.mxu0 %v522
    %v817 = vpop.f32.mrf.mxu0
    %v818 = vadd.f32 %v257, %v817
    %v819 = vpop.f32.mrf.mxu0
    %820 = vmatprep.mubr.f32.mxu0 0.0
    %821 = vmatmul.mubr.f32.gmra.mxu0 %v525
    %v822 = vpop.f32.mrf.mxu0
    %v823 = vadd.f32 %v262, %v822
    %v824 = vpop.f32.mrf.mxu0
    %825 = vmatprep.mubr.f32.mxu0 0.0
    %826 = vmatmul.mubr.f32.gmra.mxu0 %v528
    %v827 = vpop.f32.mrf.mxu0
    %v828 = vadd.f32 %v267, %v827
    %v829 = vpop.f32.mrf.mxu0
    %830 = vmatprep.mubr.f32.mxu0 0.0
    %831 = vmatmul.mubr.f32.gmra.mxu0 %v531
    %v832 = vpop.f32.mrf.mxu0
    %v833 = vadd.f32 %v272, %v832
    %v834 = vpop.f32.mrf.mxu0
    %835 = vmatprep.mubr.f32.mxu0 0.0
    %836 = vmatmul.mubr.f32.gmra.mxu0 %v534
    %v837 = vpop.f32.mrf.mxu0
    %v838 = vadd.f32 %v277, %v837
    %v839 = vpop.f32.mrf.mxu0
    %840 = vmatprep.mubr.f32.mxu0 0.0
    %841 = vmatmul.mubr.f32.gmra.mxu0 %v537
    %v842 = vpop.f32.mrf.mxu0
    %v843 = vpop.f32.mrf.mxu0
    %844 = vmatprep.mubr.f32.mxu0 0.0
    %845 = vmatmul.mubr.f32.gmra.mxu0 %v540
    %v846 = vpop.f32.mrf.mxu0
    %v847 = vpop.f32.mrf.mxu0
    %848 = vmatprep.mubr.f32.mxu0 0.0
    %849 = vmatmul.mubr.f32.gmra.mxu0 %v543
    %v850 = vpop.f32.mrf.mxu0
    %v851 = vpop.f32.mrf.mxu0
    %852 = vmatprep.mubr.f32.mxu0 0.0
    %853 = vmatmul.mubr.f32.gmra.mxu0 %v546
    %v854 = vpop.f32.mrf.mxu0
    %v855 = vpop.f32.mrf.mxu0
    %856 = vmatprep.mubr.f32.mxu0 0.0
    %857 = vmatmul.mubr.f32.gmra.mxu0 %v549
    %v858 = vpop.f32.mrf.mxu0
    %v859 = vpop.f32.mrf.mxu0
    %860 = vmatprep.mubr.f32.mxu0 0.0
    %861 = vmatmul.mubr.f32.gmra.mxu0 %v552
    %v862 = vpop.f32.mrf.mxu0
    %v863 = vpop.f32.mrf.mxu0
    %864 = vmatprep.mubr.f32.mxu0 0.0
    %865 = vmatmul.mubr.f32.gmra.mxu0 %v555
    %v866 = vpop.f32.mrf.mxu0
    %v867 = vpop.f32.mrf.mxu0
    %868 = vmatprep.mubr.f32.mxu0 0.0
    %869 = vmatmul.mubr.f32.gmra.mxu0 %v558
    %v870 = vpop.f32.mrf.mxu0
    %v871 = vpop.f32.mrf.mxu0
    %872 = vmatprep.mubr.f32.mxu0 0.0
    %873 = vmatmul.mubr.f32.gmra.mxu0 %v561
    %v874 = vpop.f32.mrf.mxu0
    %v875 = vadd.f32 %v314, %v874
    %v876 = vpop.f32.mrf.mxu0
    %877 = vmatprep.mubr.f32.mxu0 0.0
    %878 = vmatmul.mubr.f32.gmra.mxu0 %v564
    %v879 = vpop.f32.mrf.mxu0
    %v880 = vadd.f32 %v319, %v879
    %v881 = vpop.f32.mrf.mxu0
    %882 = vmatprep.mubr.f32.mxu0 0.0
    %883 = vmatmul.mubr.f32.gmra.mxu0 %v567
    %v884 = vpop.f32.mrf.mxu0
    %v885 = vadd.f32 %v324, %v884
    %v886 = vpop.f32.mrf.mxu0
    %887 = vmatprep.mubr.f32.mxu0 0.0
    %888 = vmatmul.mubr.f32.gmra.mxu0 %v570
    %v889 = vpop.f32.mrf.mxu0
    %v890 = vadd.f32 %v329, %v889
    %v891 = vpop.f32.mrf.mxu0
    %892 = vmatprep.mubr.f32.mxu0 0.0
    %893 = vmatmul.mubr.f32.gmra.mxu0 %v573
    %v894 = vpop.f32.mrf.mxu0
    %v895 = vadd.f32 %v334, %v894
    %v896 = vpop.f32.mrf.mxu0
    %897 = vmatprep.mubr.f32.mxu0 0.0
    %898 = vmatmul.mubr.f32.gmra.mxu0 %v576
    %v899 = vpop.f32.mrf.mxu0
    %v900 = vadd.f32 %v339, %v899
    %v901 = vpop.f32.mrf.mxu0
    %902 = vmatprep.mubr.f32.mxu0 0.0
    %903 = vmatmul.mubr.f32.gmra.mxu0 %v579
    %v904 = vpop.f32.mrf.mxu0
    %v905 = vadd.f32 %v344, %v904
    %v906 = vpop.f32.mrf.mxu0
    %907 = vmatprep.mubr.f32.mxu0 0.0
    %908 = vmatmul.mubr.f32.gmra.mxu0 %v582
    %v909 = vpop.f32.mrf.mxu0
    %v910 = vadd.f32 %v349, %v909
    %v911 = vpop.f32.mrf.mxu0
    %912 = vmatprep.mubr.f32.mxu0 0.0
    %913 = vmatmul.mubr.f32.gmra.mxu0 %v585
    %v914 = vpop.f32.mrf.mxu0
    %v915 = vadd.f32 %v354, %v914
    %v916 = vpop.f32.mrf.mxu0
    %917 = vmatprep.mubr.f32.mxu0 0.0
    %918 = vmatmul.mubr.f32.gmra.mxu0 %v588
    %v919 = vpop.f32.mrf.mxu0
    %v920 = vadd.f32 %v359, %v919
    %v921 = vpop.f32.mrf.mxu0
    %922 = vmatprep.mubr.f32.mxu0 0.0
    %923 = vmatmul.mubr.f32.gmra.mxu0 %v591
    %v924 = vpop.f32.mrf.mxu0
    %v925 = vadd.f32 %v364, %v924
    %v926 = vpop.f32.mrf.mxu0
    %927 = vmatprep.mubr.f32.mxu0 0.0
    %928 = vmatmul.mubr.f32.gmra.mxu0 %v594
    %v929 = vpop.f32.mrf.mxu0
    %v930 = vadd.f32 %v369, %v929
    %v931 = vpop.f32.mrf.mxu0
    %932 = vmatprep.mubr.f32.mxu0 0.0
    %933 = vmatmul.mubr.f32.gmra.mxu0 %v597
    %v934 = vpop.f32.mrf.mxu0
    %v935 = vadd.f32 %v374, %v934
    %v936 = vpop.f32.mrf.mxu0
    %937 = vmatprep.mubr.f32.mxu0 0.0
    %938 = vmatmul.mubr.f32.gmra.mxu0 %v600
    %v939 = vpop.f32.mrf.mxu0
    %v940 = vadd.f32 %v379, %v939
    %v941 = vpop.f32.mrf.mxu0
    %942 = vmatprep.mubr.f32.mxu0 0.0
    %943 = vmatmul.mubr.f32.gmra.mxu0 %v603
    %v944 = vpop.f32.mrf.mxu0
    %v945 = vadd.f32 %v384, %v944
    %v946 = vpop.f32.mrf.mxu0
    %947 = vmatprep.mubr.f32.mxu0 0.0
    %948 = vmatmul.mubr.f32.gmra.mxu0 %v606
    %v949 = vpop.f32.mrf.mxu0
    %v950 = vadd.f32 %v389, %v949
    %v951 = vpop.f32.mrf.mxu0
    %952 = vmatprep.mubr.f32.mxu0 0.0
    %953 = vmatmul.mubr.f32.gmra.mxu0 %v609
    %v954 = vpop.f32.mrf.mxu0
    %v955 = vadd.f32 %v394, %v954
    %v956 = vpop.f32.mrf.mxu0
    %957 = vmatprep.mubr.f32.mxu0 0.0
    %958 = vmatmul.mubr.f32.gmra.mxu0 %v612
    %v959 = vpop.f32.mrf.mxu0
    %v960 = vadd.f32 %v399, %v959
    %v961 = vpop.f32.mrf.mxu0
    %962 = vmatprep.mubr.f32.mxu0 0.0
    %963 = vmatmul.mubr.f32.gmra.mxu0 %v615
    %v964 = vpop.f32.mrf.mxu0
    %v965 = vadd.f32 %v404, %v964
    %v966 = vpop.f32.mrf.mxu0
    %967 = vmatprep.mubr.f32.mxu0 0.0
    %968 = vmatmul.mubr.f32.gmra.mxu0 %v618
    %v969 = vpop.f32.mrf.mxu0
    %v970 = vadd.f32 %v409, %v969
    %v971 = vpop.f32.mrf.mxu0
    %972 = vmatprep.mubr.f32.mxu0 0.0
    %973 = vmatmul.mubr.f32.gmra.mxu0 %v621
    %v974 = vpop.f32.mrf.mxu0
    %v975 = vadd.f32 %v414, %v974
    %v976 = vpop.f32.mrf.mxu0
    %977 = vmatprep.mubr.f32.mxu0 0.0
    %978 = vmatmul.mubr.f32.gmra.mxu0 %v624
    %v979 = vpop.f32.mrf.mxu0
    %v980 = vadd.f32 %v419, %v979
    %v981 = vpop.f32.mrf.mxu0
    %982 = vmatprep.mubr.f32.mxu0 0.0
    %983 = vmatmul.mubr.f32.gmra.mxu0 %v627
    %v984 = vpop.f32.mrf.mxu0
    %v985 = vadd.f32 %v424, %v984
    %v986 = vpop.f32.mrf.mxu0
    %987 = vmatprep.mubr.f32.mxu0 0.0
    %988 = vmatmul.mubr.f32.gmra.mxu0 %v630
    %v989 = vpop.f32.mrf.mxu0
    %v990 = vadd.f32 %v429, %v989
    %v991 = vpop.f32.mrf.mxu0
    %992 = vmatprep.mubr.f32.mxu0 0.0
    %993 = vmatmul.mubr.f32.gmra.mxu0 %v633
    %v994 = vpop.f32.mrf.mxu0
    %v995 = vpop.f32.mrf.mxu0
    %996 = vmatprep.mubr.f32.mxu0 0.0
    %997 = vmatmul.mubr.f32.gmra.mxu0 %v636
    %v998 = vpop.f32.mrf.mxu0
    %v999 = vpop.f32.mrf.mxu0
    %1000 = vmatprep.mubr.f32.mxu0 0.0
    %1001 = vmatmul.mubr.f32.gmra.mxu0 %v639
    %v1002 = vpop.f32.mrf.mxu0
    %v1003 = vpop.f32.mrf.mxu0
    %1004 = vmatprep.mubr.f32.mxu0 0.0
    %1005 = vmatmul.mubr.f32.gmra.mxu0 %v642
    %v1006 = vpop.f32.mrf.mxu0
    %v1007 = vpop.f32.mrf.mxu0
    %1008 = vmatprep.mubr.f32.mxu0 0.0
    %1009 = vmatmul.mubr.f32.gmra.mxu0 %v645
    %v1010 = vpop.f32.mrf.mxu0
    %v1011 = vpop.f32.mrf.mxu0
    %1012 = vmatprep.mubr.f32.mxu0 0.0
    %1013 = vmatmul.mubr.f32.gmra.mxu0 %v648
    %v1014 = vpop.f32.mrf.mxu0
    %v1015 = vpop.f32.mrf.mxu0
    %1016 = vmatprep.mubr.f32.mxu0 0.0
    %1017 = vmatmul.mubr.f32.gmra.mxu0 %v651
    %v1018 = vpop.f32.mrf.mxu0
    %v1019 = vpop.f32.mrf.mxu0
    %1020 = vmatprep.mubr.f32.mxu0 0.0
    %1021 = vmatmul.mubr.f32.gmra.mxu0 %v654
    %v1022 = vpop.f32.mrf.mxu0
    %v1023 = vpop.f32.mrf.mxu0
    %1024 = vdwg.mxu0
    %v1025 = vmax.f32 %v723, 0.0
    %v1026 = vmax.f32 %v728, 0.0
    %v1027 = vmax.f32 %v733, 0.0
    %v1028 = vmax.f32 %v738, 0.0
    %v1029 = vmax.f32 %v743, 0.0
    %v1030 = vmax.f32 %v748, 0.0
    %v1031 = vmax.f32 %v753, 0.0
    %v1032 = vmax.f32 %v758, 0.0
    %v1033 = vmax.f32 %v763, 0.0
    %v1034 = vmax.f32 %v768, 0.0
    %v1035 = vmax.f32 %v773, 0.0
    %v1036 = vmax.f32 %v778, 0.0
    %v1037 = vmax.f32 %v783, 0.0
    %v1038 = vmax.f32 %v788, 0.0
    %v1039 = vmax.f32 %v793, 0.0
    %v1040 = vmax.f32 %v798, 0.0
    %v1041 = vmax.f32 %v803, 0.0
    %v1042 = vmax.f32 %v808, 0.0
    %v1043 = vmax.f32 %v813, 0.0
    %v1044 = vmax.f32 %v818, 0.0
    %v1045 = vmax.f32 %v823, 0.0
    %v1046 = vmax.f32 %v828, 0.0
    %v1047 = vmax.f32 %v833, 0.0
    %v1048 = vmax.f32 %v838, 0.0
    %v1049 = vmax.f32 %v875, 0.0
    %v1050 = vmax.f32 %v880, 0.0
    %v1051 = vmax.f32 %v885, 0.0
    %v1052 = vmax.f32 %v890, 0.0
    %v1053 = vmax.f32 %v895, 0.0
    %v1054 = vmax.f32 %v900, 0.0
    %v1055 = vmax.f32 %v905, 0.0
    %v1056 = vmax.f32 %v910, 0.0
    %v1057 = vmax.f32 %v915, 0.0
    %v1058 = vmax.f32 %v920, 0.0
    %v1059 = vmax.f32 %v925, 0.0
    %v1060 = vmax.f32 %v930, 0.0
    %v1061 = vmax.f32 %v935, 0.0
    %v1062 = vmax.f32 %v940, 0.0
    %v1063 = vmax.f32 %v945, 0.0
    %v1064 = vmax.f32 %v950, 0.0
    %v1065 = vmax.f32 %v955, 0.0
    %v1066 = vmax.f32 %v960, 0.0
    %v1067 = vmax.f32 %v965, 0.0
    %v1068 = vmax.f32 %v970, 0.0
    %v1069 = vmax.f32 %v975, 0.0
    %v1070 = vmax.f32 %v980, 0.0
    %v1071 = vmax.f32 %v985, 0.0
    %v1072 = vmax.f32 %v990, 0.0
    %v1073 = vmax.f32 %v1025, %v1049
    %v1074 = vmax.f32 %v1026, %v1050
    %v1075 = vmax.f32 %v1027, %v1051
    %v1076 = vmax.f32 %v1028, %v1052
    %v1077 = vmax.f32 %v1029, %v1053
    %v1078 = vmax.f32 %v1030, %v1054
    %v1079 = vmax.f32 %v1031, %v1055
    %v1080 = vmax.f32 %v1032, %v1056
    %v1081 = vmax.f32 %v1033, %v1057
    %v1082 = vmax.f32 %v1034, %v1058
    %v1083 = vmax.f32 %v1035, %v1059
    %v1084 = vmax.f32 %v1036, %v1060
    %v1085 = vmax.f32 %v1037, %v1061
    %v1086 = vmax.f32 %v1038, %v1062
    %v1087 = vmax.f32 %v1039, %v1063
    %v1088 = vmax.f32 %v1040, %v1064
    %v1089 = vmax.f32 %v1041, %v1065
    %v1090 = vmax.f32 %v1042, %v1066
    %v1091 = vmax.f32 %v1043, %v1067
    %v1092 = vmax.f32 %v1044, %v1068
    %v1093 = vmax.f32 %v1045, %v1069
    %v1094 = vmax.f32 %v1046, %v1070
    %v1095 = vmax.f32 %v1047, %v1071
    %v1096 = vmax.f32 %v1048, %v1072
    %v1097 = vld [vmem:[%s3] sm:$0xff]
    %v1098 = vld [vmem:[%s3 + $0x8] sm:$0xff]
    %v1099 = vld [vmem:[%s3 + $0x10] sm:$0xff]
    %v1100 = vld [vmem:[%s3 + $0x18] sm:$0xff]
    %v1101 = vld [vmem:[%s3 + $0x20] sm:$0xff]
    %v1102 = vld [vmem:[%s3 + $0x28] sm:$0xff]
    %v1103 = vld [vmem:[%s3 + $0x30] sm:$0xff]
    %v1104 = vld [vmem:[%s3 + $0x38] sm:$0xff]
    %v1105 = vld [vmem:[%s3 + $0x40] sm:$0xff]
    %v1106 = vld [vmem:[%s3 + $0x48] sm:$0xff]
    %v1107 = vld [vmem:[%s3 + $0x50] sm:$0xff]
    %v1108 = vld [vmem:[%s3 + $0x58] sm:$0xff]
    %v1109 = vld [vmem:[%s3 + $0x60] sm:$0xff]
    %v1110 = vld [vmem:[%s3 + $0x68] sm:$0xff]
    %v1111 = vld [vmem:[%s3 + $0x70] sm:$0xff]
    %v1112 = vld [vmem:[%s3 + $0x78] sm:$0xff]
    %v1113 = vld [vmem:[%s4] sm:$0xff]
    %v1114 = vld [vmem:[%s4 + $0x8] sm:$0xff]
    %v1115 = vld [vmem:[%s4 + $0x10] sm:$0xff]
    %v1116 = vld [vmem:[%s4 + $0x18] sm:$0xff]
    %v1117 = vld [vmem:[%s4 + $0x20] sm:$0xff]
    %v1118 = vld [vmem:[%s4 + $0x28] sm:$0xff]
    %v1119 = vld [vmem:[%s4 + $0x30] sm:$0xff]
    %v1120 = vld [vmem:[%s4 + $0x38] sm:$0xff]
    %1122 = vset.pattern.permute.xlu0 0
    %1123 = vperm.xlu0 %1122, %v1113
    %v1124 = vpop.permute.xlu0 %1123
    %1127 = vset.pattern.permute.xlu0 0
    %1128 = vperm.xlu0 %1127, %v1114
    %v1129 = vpop.permute.xlu0 %1128
    %1132 = vset.pattern.permute.xlu0 0
    %1133 = vperm.xlu0 %1132, %v1115
    %v1134 = vpop.permute.xlu0 %1133
    %1137 = vset.pattern.permute.xlu0 0
    %1138 = vperm.xlu0 %1137, %v1116
    %v1139 = vpop.permute.xlu0 %1138
    %1142 = vset.pattern.permute.xlu0 0
    %1143 = vperm.xlu0 %1142, %v1117
    %v1144 = vpop.permute.xlu0 %1143
    %1147 = vset.pattern.permute.xlu0 0
    %1148 = vperm.xlu0 %1147, %v1118
    %v1149 = vpop.permute.xlu0 %1148
    %1152 = vset.pattern.permute.xlu0 0
    %1153 = vperm.xlu0 %1152, %v1119
    %v1154 = vpop.permute.xlu0 %1153
    %1157 = vset.pattern.permute.xlu0 0
    %1158 = vperm.xlu0 %1157, %v1120
    %v1159 = vpop.permute.xlu0 %1158
    %vm1161 = vcmask 523264
    %v1163 = vsel %vm1161, %v1098, 0
    %v1166 = vsel %vm1161, %v1100, 0
    %v1169 = vsel %vm1161, %v1102, 0
    %v1172 = vsel %vm1161, %v1104, 0
    %v1175 = vsel %vm1161, %v1106, 0
    %v1178 = vsel %vm1161, %v1108, 0
    %v1181 = vsel %vm1161, %v1110, 0
    %v1184 = vsel %vm1161, %v1112, 0
    %1186 = vmatprep.subr.mxu0 0.0
    %1187 = vmatpush1.msra.mxu0 %v1088
    %1188 = vmatprep.subr.mxu0 0.0
    %1189 = vmatpush1.msra.mxu0 %v1087
    %1190 = vmatprep.subr.mxu0 0.0
    %1191 = vmatpush1.msra.mxu0 %v1086
    %1192 = vmatprep.subr.mxu0 0.0
    %1193 = vmatpush1.msra.mxu0 %v1085
    %1194 = vmatprep.subr.mxu0 0.0
    %1195 = vmatpush1.msra.mxu0 %v1084
    %1196 = vmatprep.subr.mxu0 0.0
    %1197 = vmatpush1.msra.mxu0 %v1083
    %1198 = vmatprep.subr.mxu0 0.0
    %1199 = vmatpush1.msra.mxu0 %v1082
    %1200 = vmatprep.subr.mxu0 0.0
    %1201 = vmatpush1.msra.mxu0 %v1081
    %1202 = vmatprep.subr.mxu0 0.0
    %1203 = vmatpush1.msra.mxu0 %v1080
    %1204 = vmatprep.subr.mxu0 0.0
    %1205 = vmatpush1.msra.mxu0 %v1079
    %1206 = vmatprep.subr.mxu0 0.0
    %1207 = vmatpush1.msra.mxu0 %v1078
    %1208 = vmatprep.subr.mxu0 0.0
    %1209 = vmatpush1.msra.mxu0 %v1077
    %1210 = vmatprep.subr.mxu0 0.0
    %1211 = vmatpush1.msra.mxu0 %v1076
    %1212 = vmatprep.subr.mxu0 0.0
    %1213 = vmatpush1.msra.mxu0 %v1075
    %1214 = vmatprep.subr.mxu0 0.0
    %1215 = vmatpush1.msra.mxu0 %v1074
    %1216 = vmatprep.subr.mxu0 0.0
    %1217 = vmatpush1.msra.mxu0 %v1073
    %1218 = vmatprep.subr.mxu0 0.0
    %1219 = vmatpush2.msra.mxu0 0.0
    %1220 = vmatprep.subr.mxu0 0.0
    %1221 = vmatpush2.msra.mxu0 0.0
    %1222 = vmatprep.subr.mxu0 0.0
    %1223 = vmatpush2.msra.mxu0 0.0
    %1224 = vmatprep.subr.mxu0 0.0
    %1225 = vmatpush2.msra.mxu0 0.0
    %1226 = vmatprep.subr.mxu0 0.0
    %1227 = vmatpush2.msra.mxu0 0.0
    %1228 = vmatprep.subr.mxu0 0.0
    %1229 = vmatpush2.msra.mxu0 0.0
    %1230 = vmatprep.subr.mxu0 0.0
    %1231 = vmatpush2.msra.mxu0 0.0
    %1232 = vmatprep.subr.mxu0 0.0
    %1233 = vmatpush2.msra.mxu0 0.0
    %1234 = vmatprep.subr.mxu0 0.0
    %1235 = vmatpush2.msra.mxu0 %v1096
    %1236 = vmatprep.subr.mxu0 0.0
    %1237 = vmatpush2.msra.mxu0 %v1095
    %1238 = vmatprep.subr.mxu0 0.0
    %1239 = vmatpush2.msra.mxu0 %v1094
    %1240 = vmatprep.subr.mxu0 0.0
    %1241 = vmatpush2.msra.mxu0 %v1093
    %1242 = vmatprep.subr.mxu0 0.0
    %1243 = vmatpush2.msra.mxu0 %v1092
    %1244 = vmatprep.subr.mxu0 0.0
    %1245 = vmatpush2.msra.mxu0 %v1091
    %1246 = vmatprep.subr.mxu0 0.0
    %1247 = vmatpush2.msra.mxu0 %v1090
    %1248 = vmatprep.subr.mxu0 0.0
    %1249 = vmatpush2.msra.mxu0 %v1089
    %1250 = vmatprep.mubr.f32.mxu0 %v1163
    %1251 = vmatmul.mubr.f32.gmra.mxu0 %v1097
    %v1252 = vpop.f32.mrf.mxu0
    %v1253 = vadd.f32 %v1124, %v1252
    %v1254 = vpop.f32.mrf.mxu0
    %1255 = vmatprep.mubr.f32.mxu0 %v1166
    %1256 = vmatmul.mubr.f32.gmra.mxu0 %v1099
    %v1257 = vpop.f32.mrf.mxu0
    %v1258 = vadd.f32 %v1129, %v1257
    %v1259 = vpop.f32.mrf.mxu0
    %1260 = vmatprep.mubr.f32.mxu0 %v1169
    %1261 = vmatmul.mubr.f32.gmra.mxu0 %v1101
    %v1262 = vpop.f32.mrf.mxu0
    %v1263 = vadd.f32 %v1134, %v1262
    %v1264 = vpop.f32.mrf.mxu0
    %1265 = vmatprep.mubr.f32.mxu0 %v1172
    %1266 = vmatmul.mubr.f32.gmra.mxu0 %v1103
    %v1267 = vpop.f32.mrf.mxu0
    %v1268 = vadd.f32 %v1139, %v1267
    %v1269 = vpop.f32.mrf.mxu0
    %1270 = vmatprep.mubr.f32.mxu0 %v1175
    %1271 = vmatmul.mubr.f32.gmra.mxu0 %v1105
    %v1272 = vpop.f32.mrf.mxu0
    %v1273 = vadd.f32 %v1144, %v1272
    %v1274 = vpop.f32.mrf.mxu0
    %1275 = vmatprep.mubr.f32.mxu0 %v1178
    %1276 = vmatmul.mubr.f32.gmra.mxu0 %v1107
    %v1277 = vpop.f32.mrf.mxu0
    %v1278 = vadd.f32 %v1149, %v1277
    %v1279 = vpop.f32.mrf.mxu0
    %1280 = vmatprep.mubr.f32.mxu0 %v1181
    %1281 = vmatmul.mubr.f32.gmra.mxu0 %v1109
    %v1282 = vpop.f32.mrf.mxu0
    %v1283 = vadd.f32 %v1154, %v1282
    %v1284 = vpop.f32.mrf.mxu0
    %1285 = vmatprep.mubr.f32.mxu0 %v1184
    %1286 = vmatmul.mubr.f32.gmra.mxu0 %v1111
    %v1287 = vpop.f32.mrf.mxu0
    %v1288 = vadd.f32 %v1159, %v1287
    %v1289 = vpop.f32.mrf.mxu0
    %1290 = vdwg.mxu0
    %v1291 = vmax.f32 %v1253, 0.0
    %v1292 = vmax.f32 %v1258, 0.0
    %v1293 = vmax.f32 %v1263, 0.0
    %v1294 = vmax.f32 %v1268, 0.0
    %v1295 = vmax.f32 %v1273, 0.0
    %v1296 = vmax.f32 %v1278, 0.0
    %v1297 = vmax.f32 %v1283, 0.0
    %v1298 = vmax.f32 %v1288, 0.0
    %v1299 = vld [vmem:[%s5] sm:$0x1]
    %v1300 = vld [vmem:[#allocation2] sm:$0x1]
    %1302 = vset.pattern.permute.xlu0 0
    %1303 = vperm.xlu0 %1302, %v1300
    %v1304 = vpop.permute.xlu0 %1303
    %v1306 = vlaneseq
    %v1307 = vshrl.u32 %v1306, 7
    %v1308 = vsub.s32 0, %v1307
    %v1309 = vrot.slane %v1304, %v1308
    %v1311 = vsel %vm1161, %v1299, 0
    %1313 = vmatprep.subr.mxu0 0.0
    %1314 = vmatpush1.msra.mxu0 0.0
    %1315 = vmatprep.subr.mxu0 0.0
    %1316 = vmatpush1.msra.mxu0 0.0
    %1317 = vmatprep.subr.mxu0 0.0
    %1318 = vmatpush1.msra.mxu0 0.0
    %1319 = vmatprep.subr.mxu0 0.0
    %1320 = vmatpush1.msra.mxu0 0.0
    %1321 = vmatprep.subr.mxu0 0.0
    %1322 = vmatpush1.msra.mxu0 0.0
    %1323 = vmatprep.subr.mxu0 0.0
    %1324 = vmatpush1.msra.mxu0 0.0
    %1325 = vmatprep.subr.mxu0 0.0
    %1326 = vmatpush1.msra.mxu0 0.0
    %1327 = vmatprep.subr.mxu0 0.0
    %1328 = vmatpush1.msra.mxu0 0.0
    %1329 = vmatprep.subr.mxu0 0.0
    %1330 = vmatpush1.msra.mxu0 %v1298
    %1331 = vmatprep.subr.mxu0 0.0
    %1332 = vmatpush1.msra.mxu0 %v1297
    %1333 = vmatprep.subr.mxu0 0.0
    %1334 = vmatpush1.msra.mxu0 %v1296
    %1335 = vmatprep.subr.mxu0 0.0
    %1336 = vmatpush1.msra.mxu0 %v1295
    %1337 = vmatprep.subr.mxu0 0.0
    %1338 = vmatpush1.msra.mxu0 %v1294
    %1339 = vmatprep.subr.mxu0 0.0
    %1340 = vmatpush1.msra.mxu0 %v1293
    %1341 = vmatprep.subr.mxu0 0.0
    %1342 = vmatpush1.msra.mxu0 %v1292
    %1343 = vmatprep.subr.mxu0 0.0
    %1344 = vmatpush1.msra.mxu0 %v1291
    %1345 = vmatprep.subr.mxu0 0.0
    %1346 = vmatpush2.msra.mxu0 0.0
    %1347 = vmatprep.subr.mxu0 0.0
    %1348 = vmatpush2.msra.mxu0 0.0
    %1349 = vmatprep.subr.mxu0 0.0
    %1350 = vmatpush2.msra.mxu0 0.0
    %1351 = vmatprep.subr.mxu0 0.0
    %1352 = vmatpush2.msra.mxu0 0.0
    %1353 = vmatprep.subr.mxu0 0.0
    %1354 = vmatpush2.msra.mxu0 0.0
    %1355 = vmatprep.subr.mxu0 0.0
    %1356 = vmatpush2.msra.mxu0 0.0
    %1357 = vmatprep.subr.mxu0 0.0
    %1358 = vmatpush2.msra.mxu0 0.0
    %1359 = vmatprep.subr.mxu0 0.0
    %1360 = vmatpush2.msra.mxu0 0.0
    %1361 = vmatprep.subr.mxu0 0.0
    %1362 = vmatpush2.msra.mxu0 0.0
    %1363 = vmatprep.subr.mxu0 0.0
    %1364 = vmatpush2.msra.mxu0 0.0
    %1365 = vmatprep.subr.mxu0 0.0
    %1366 = vmatpush2.msra.mxu0 0.0
    %1367 = vmatprep.subr.mxu0 0.0
    %1368 = vmatpush2.msra.mxu0 0.0
    %1369 = vmatprep.subr.mxu0 0.0
    %1370 = vmatpush2.msra.mxu0 0.0
    %1371 = vmatprep.subr.mxu0 0.0
    %1372 = vmatpush2.msra.mxu0 0.0
    %1373 = vmatprep.subr.mxu0 0.0
    %1374 = vmatpush2.msra.mxu0 0.0
    %1375 = vmatprep.subr.mxu0 0.0
    %1376 = vmatpush2.msra.mxu0 0.0
    %1377 = vmatprep.mubr.f32.mxu0 0.0
    %1378 = vmatmul.mubr.f32.gmra.mxu0 %v1311
    %v1379 = vpop.f32.mrf.mxu0
    %v1380 = vadd.f32 %v1309, %v1379
    %v1381 = vpop.f32.mrf.mxu0
    %1382 = vdwg.mxu0
    %1383 = vst [vmem:[#allocation3] sm:$0x1] %v1380
    // Predicated region
    $region30: #{tpu_custom_call.1} parent=1 // pred_check
      _
    $region31: #{tpu_custom_call.1} parent=1 // pred_check_branch
      %1385 = sbr.rel (0) target = $region33
    $region32: #{tpu_custom_call.1} parent=1 // pred_region
      %s1387 = ssub.s32 16, 16
      %1388 = vsyncadd [#allocation4], %s1387
      %s1390 = sshll.u32 [#allocation3], 4
      %s1391 = int_to_ptr.vmem [resolvable:$true] %s1390
      %1393 = dma.vmem_to_hbm [thread:$0]  %s1391, 16, %s7, [#allocation4]
    $region33: #{tpu_custom_call.1} parent=1 // pred_fallthru
      _
    // Predicated region
    $region34: #{tpu_custom_call.1} parent=1 // pred_check
      _
    $region35: #{tpu_custom_call.1} parent=1 // pred_check_branch
      %1395 = sbr.rel (0) target = $region37
    $region36: #{tpu_custom_call.1} parent=1 // pred_region
      %1396 = dma.done [#allocation4], 16
    $region37: #{tpu_custom_call.1} parent=1 // pred_fallthru
      _
    %1397 = vsyncpa [#allocation4], 1

</llo_original>
